<compile_context>
chip_gen: v7x
topology: tpu7x:2x2x1
jax: 0.10.0
libtpu: 0.0.40
codegen_flags: <defaults>
</compile_context>

<pallas_src>
import functools

import jax
import jax.numpy as jnp
from jax import lax
from jax.experimental import pallas as pl
from jax.experimental.pallas import tpu as pltpu


def _round_up(x, m):
    return (x + m - 1) // m * m


def _cdiv(a, b):
    return -(-a // b)


def _vmem_capacity_bytes():
    try:
        info = pltpu.get_tpu_info()
        return int(getattr(info, "vmem_capacity_bytes", 64 * 2**20))
    except Exception:  # best-effort hardware query
        return 64 * 2**20


def _backwarp_kernel(koff_ref, xs_ref, a_ref, w_ref, o_ref, acc_ref, *,
                     C, Cp, Kt, T, mxu_dtype):
    n = pl.program_id(0)
    t = pl.program_id(1)
    k = pl.program_id(2)
    nk = pl.num_programs(2)

    @pl.when(k == 0)
    def _init():
        acc_ref[...] = jnp.zeros_like(acc_ref)

    # Global start of this K chunk.  The xs index_map applied the same per-tile
    # offset, so xs_ref already holds exactly this chunk of the corner slabs.
    chunk_start = (k + koff_ref[n, t]) * Kt
    a_local = a_ref[0] - chunk_start                          # (1, T) int32

    # Unweighted one-hot gather matrix: sublane-iota compare + cast (~2 VALU
    # ops/element on the hot path).
    row = lax.broadcasted_iota(jnp.int32, (Kt, T), 0)
    b = (row == a_local).astype(mxu_dtype)                    # (Kt, T)

    # One MXU matmul gathers all four bilinear corners at once; the xs rows
    # are Cp-aligned slabs of the padded input shifted by {0, 1, Win, Win+1}.
    r = jnp.dot(xs_ref[0], b, preferred_element_type=jnp.float32)   # (4Cp, T)

    w = w_ref[0]                                              # (4, T) f32
    acc_ref[...] += (w[0:1, :] * r[0:Cp, :]
                     + w[1:2, :] * r[Cp:2 * Cp, :]
                     + w[2:3, :] * r[2 * Cp:3 * Cp, :]
                     + w[3:4, :] * r[3 * Cp:4 * Cp, :])

    @pl.when(k == nk - 1)
    def _finalize():
        o_ref[0] = acc_ref[0:C, :].astype(o_ref.dtype)


def backwarp(ten_input, ten_flow, *, t_target=None, k_chunk=512,
             use_bf16_mxu=None):
    """Pallas equivalent of BackWarp.forward(tenInput, tenFlow). NCHW in/out."""
    N, C, Hin, Win = ten_input.shape
    Nf, two, H, W = ten_flow.shape
    assert Nf == N and two == 2
    HW_out, HW_in = H * W, Hin * Win
    P = Win + 1                     # front pad of the flattened input
    L_min = HW_in + P               # anchors with nonzero weight live in [0, L_min)

    if use_bf16_mxu is None:        # exact f32 path unless the input is bf16
        use_bf16_mxu = ten_input.dtype == jnp.bfloat16
    mxu_dtype = jnp.bfloat16 if use_bf16_mxu else jnp.float32

    vmem_cap = _vmem_capacity_bytes()
    if t_target is None:
        # generation-aware output tile: v7x (64 MiB VMEM) vs v5e/v6e (128 MiB)
        t_target = 2048 if vmem_cap > 64 * 2**20 else 1024

    # Output-tile (lane) size and padded output length.
    T = min(t_target, _round_up(HW_out, 128))
    HW_pad = _round_up(HW_out, T)
    n_t = HW_pad // T

    # Gather (K) chunk size and padded gather length.
    Kt = _round_up(min(k_chunk, _round_up(L_min, 128)), 128)
    n_chunks = _cdiv(L_min, Kt)
    L_pad = n_chunks * Kt

    # ---- Flow-dependent setup (anchors + masked bilinear weights), done once
    # in the wrapper so the per-tile K-window (koff) is exactly consistent.
    f32 = jnp.float32
    f = ten_flow.astype(f32).reshape(N, 2, HW_out)
    p = jnp.arange(HW_out, dtype=jnp.int32)
    px = (p % W).astype(f32)
    py = (p // W).astype(f32)
    # base grid: linspace(-1 + 1/W, 1 - 1/W, W) == (2*px + 1)/W - 1
    gx = (2.0 * px + 1.0) / W - 1.0 + f[:, 0] / ((Win - 1.0) / 2.0)
    gy = (2.0 * py + 1.0) / H - 1.0 + f[:, 1] / ((Hin - 1.0) / 2.0)
    # unnormalize (align_corners=False): s = ((g + 1) * size - 1) / 2
    sx = ((gx + 1.0) * Win - 1.0) * 0.5
    sy = ((gy + 1.0) * Hin - 1.0) * 0.5
    x0f = jnp.floor(sx); y0f = jnp.floor(sy)
    wx1 = sx - x0f; wx0 = 1.0 - wx1
    wy1 = sy - y0f; wy0 = 1.0 - wy1
    x0 = x0f.astype(jnp.int32); y0 = y0f.astype(jnp.int32)
    x1 = x0 + 1; y1 = y0 + 1
    vx0 = (x0 >= 0) & (x0 < Win); vx1 = (x1 >= 0) & (x1 < Win)
    vy0 = (y0 >= 0) & (y0 < Hin); vy1 = (y1 >= 0) & (y1 < Hin)
    zero = jnp.zeros((), f32)
    # zeros padding: OOB corner -> zero weight.  Order matches the xs slabs.
    w4 = jnp.stack([jnp.where(vy0 & vx0, wy0 * wx0, zero),
                    jnp.where(vy0 & vx1, wy0 * wx1, zero),
                    jnp.where(vy1 & vx0, wy1 * wx0, zero),
                    jnp.where(vy1 & vx1, wy1 * wx1, zero)], axis=1)  # (N,4,HW)
    # Anchor = padded flat index of the (y0, x0) corner.  An anchor outside
    # [0, L_min) implies all four corner weights are zero, so clipping is safe.
    anc = jnp.clip(y0 * Win + x0 + P, 0, L_min - 1)                  # (N, HW)

    if HW_pad != HW_out:
        pad = HW_pad - HW_out
        anc = jnp.pad(anc, ((0, 0), (0, pad)), mode="edge")   # keep span tight
        w4 = jnp.pad(w4, ((0, 0), (0, 0), (0, pad)))          # zero weights

    # ---- Per-(batch, tile) K-window restriction (scalar prefetch).
    a_tiles = anc.reshape(N, n_t, T)
    cmin = jnp.min(a_tiles, axis=-1) // Kt       # first needed chunk per tile
    cmax = jnp.max(a_tiles, axis=-1) // Kt       # last needed chunk per tile
    try:
        # Concrete flow (eager call): bound the per-tile K scan.  NOTE: nk
        # becomes data-dependent, so distinct flows may trigger recompiles.
        nk = max(int(jax.device_get(jnp.max(cmax - cmin + 1))), 1)
        koff = jnp.minimum(cmin, n_chunks - nk).astype(jnp.int32)
    except Exception:
        # Traced flow (e.g. under jit): fall back to scanning the full range.
        nk = n_chunks
        koff = jnp.zeros((N, n_t), jnp.int32)

    # ---- Zero-padded flattened input and its 4 shifted, sublane-aligned slabs.
    Cp = _round_up(C, 8)
    xs_dtype = mxu_dtype
    x_pad = jnp.zeros((N, Cp, L_pad + Win + 1), xs_dtype)
    x_pad = x_pad.at[:, :C, P:P + HW_in].set(
        ten_input.reshape(N, C, HW_in).astype(xs_dtype))
    # TODO(synk): replace the 4x slab duplication with a manual halo-window DMA
    # (memory_space=pl.ANY) to cut xs HBM bytes by ~4x.
    offs = (0, 1, Win, Win + 1)     # (y0,x0), (y0,x1), (y1,x0), (y1,x1)
    xs = jnp.concatenate([x_pad[:, :, d:d + L_pad] for d in offs], axis=1)

    anc = anc.reshape(N, 1, HW_pad)

    kernel = functools.partial(_backwarp_kernel, C=C, Cp=Cp, Kt=Kt, T=T,
                               mxu_dtype=mxu_dtype)

    out_itemsize = jnp.dtype(ten_input.dtype).itemsize
    xs_itemsize = jnp.dtype(xs_dtype).itemsize
    flops = 2 * N * n_t * nk * (4 * Cp) * Kt * T
    bytes_accessed = (N * n_t * nk * (4 * Cp) * Kt * xs_itemsize
                      + w4.size * 4 + anc.size * 4
                      + N * C * HW_pad * out_itemsize)
    vmem_limit = 40 * 2**20 if vmem_cap <= 64 * 2**20 else 48 * 2**20

    out = pl.pallas_call(
        kernel,
        out_shape=jax.ShapeDtypeStruct((N, C, HW_pad), ten_input.dtype),
        grid_spec=pltpu.PrefetchScalarGridSpec(
            num_scalar_prefetch=1,
            grid=(N, n_t, nk),
            in_specs=[
                pl.BlockSpec((1, 4 * Cp, Kt),
                             lambda n, t, k, koff: (n, 0, k + koff[n, t])),
                pl.BlockSpec((1, 1, T), lambda n, t, k, koff: (n, 0, t)),
                pl.BlockSpec((1, 4, T), lambda n, t, k, koff: (n, 0, t)),
            ],
            out_specs=pl.BlockSpec((1, C, T), lambda n, t, k, koff: (n, 0, t)),
            scratch_shapes=[pltpu.VMEM((Cp, T), jnp.float32)],
        ),
        compiler_params=pltpu.CompilerParams(
            dimension_semantics=("parallel", "parallel", "arbitrary"),
            vmem_limit_bytes=vmem_limit,
        ),
        cost_estimate=pl.CostEstimate(flops=int(flops), transcendentals=0,
                                      bytes_accessed=int(bytes_accessed)),
    )(koff, xs, anc, w4)
    return out[:, :, :HW_out].reshape(N, C, H, W)


def backwarp_ref(x, flow):
    """Pure-JAX reference (torch grid_sample bilinear/zeros/align_corners=False)."""
    N, C, Hin, Win = x.shape
    _, _, H, W = flow.shape
    xs = jnp.arange(W, dtype=jnp.float32)
    ys = jnp.arange(H, dtype=jnp.float32)
    gx = ((2.0 * xs + 1.0) / W - 1.0)[None, None, :] + flow[:, 0] / ((Win - 1.0) / 2.0)
    gy = ((2.0 * ys + 1.0) / H - 1.0)[None, :, None] + flow[:, 1] / ((Hin - 1.0) / 2.0)
    sx = ((gx + 1.0) * Win - 1.0) * 0.5
    sy = ((gy + 1.0) * Hin - 1.0) * 0.5
    x0f = jnp.floor(sx); y0f = jnp.floor(sy)
    wx1 = sx - x0f; wx0 = 1.0 - wx1
    wy1 = sy - y0f; wy0 = 1.0 - wy1
    x0 = x0f.astype(jnp.int32); y0 = y0f.astype(jnp.int32)
    x1 = x0 + 1; y1 = y0 + 1

    def gather(yi, xi):
        valid = (xi >= 0) & (xi < Win) & (yi >= 0) & (yi < Hin)
        xc = jnp.clip(xi, 0, Win - 1)
        yc = jnp.clip(yi, 0, Hin - 1)
        v = x[jnp.arange(N)[:, None, None, None],
              jnp.arange(C)[None, :, None, None],
              yc[:, None, :, :], xc[:, None, :, :]]
        return v * valid[:, None, :, :].astype(x.dtype)

    return (gather(y0, x0) * (wy0 * wx0)[:, None]
            + gather(y0, x1) * (wy0 * wx1)[:, None]
            + gather(y1, x0) * (wy1 * wx0)[:, None]
            + gather(y1, x1) * (wy1 * wx1)[:, None])


if __name__ == "__main__":
    key = jax.random.PRNGKey(0)
    k1, k2 = jax.random.split(key)
    N, C, H, W = 2, 4, 16, 16
    ten_input = jax.random.normal(k1, (N, C, H, W), dtype=jnp.float32)
    ten_flow = 3.0 * jax.random.normal(k2, (N, 2, H, W), dtype=jnp.float32)

    out = backwarp(ten_input, ten_flow)
    out = jax.block_until_ready(out)

    ref = backwarp_ref(ten_input, ten_flow)
    assert out.shape == (N, C, H, W)
    err = float(jnp.max(jnp.abs(out - ref)))
    assert jnp.allclose(out, ref, atol=1e-4, rtol=1e-4), err
    print("KERNEL_OK")
</pallas_src>

<mosaic_0001>
module attributes {stable_mosaic.version = 11 : i64} {
  func.func @_backwarp_kernel(%arg0: i32, %arg1: i32, %arg2: i32, %arg3: memref<2x1xi32, #tpu.memory_space<smem>>, %arg4: memref<1x32x384xf32, #tpu.memory_space<vmem>>, %arg5: memref<1x1x256xi32, #tpu.memory_space<vmem>>, %arg6: memref<1x4x256xf32, #tpu.memory_space<vmem>>, %arg7: memref<1x4x256xf32, #tpu.memory_space<vmem>>, %arg8: memref<8x256xf32, #tpu.memory_space<vmem>>) attributes {dimension_semantics = [#tpu.dimension_semantics<parallel>, #tpu.dimension_semantics<parallel>, #tpu.dimension_semantics<arbitrary>], iteration_bounds = array<i64: 2, 1, 1>, scalar_prefetch = 1 : i64, scratch_operands = 1 : i64, tpu.core_type = #tpu.core_type<tc>, window_params = [{transform_indices = @transform_0, window_bounds = array<i64: 1, 32, 384>}, {transform_indices = @transform_1, window_bounds = array<i64: 1, 1, 256>}, {transform_indices = @transform_2, window_bounds = array<i64: 1, 4, 256>}, {transform_indices = @transform_3, window_bounds = array<i64: 1, 4, 256>}]} {
    %c0_i32 = arith.constant 0 : i32
    %0 = arith.cmpi eq, %arg2, %c0_i32 : i32
    %1 = arith.extui %0 : i1 to i32
    %c0_i32_0 = arith.constant 0 : i32
    %2 = arith.cmpi ne, %1, %c0_i32_0 : i32
    scf.if %2 {
      %cst_15 = arith.constant 0.000000e+00 : f32
      %47 = vector.broadcast %cst_15 : f32 to vector<8x256xf32>
      %c0_16 = arith.constant 0 : index
      %c0_17 = arith.constant 0 : index
      %48 = vector.load %arg8[%c0_16, %c0_17] : memref<8x256xf32, #tpu.memory_space<vmem>>, vector<8x256xf32>
      tpu.vector_store %arg8[%c0_16, %c0_17], %47 {strides = array<i32>} : memref<8x256xf32, #tpu.memory_space<vmem>>, vector<8x256xf32>,
    } else {
    }
    %3 = arith.index_cast %arg0 : i32 to index
    %4 = arith.index_cast %arg1 : i32 to index
    %5 = memref.load %arg3[%3, %4] : memref<2x1xi32, #tpu.memory_space<smem>>
    %6 = arith.addi %arg2, %5 : i32
    %c384_i32 = arith.constant 384 : i32
    %7 = arith.muli %6, %c384_i32 : i32
    %c0 = arith.constant 0 : index
    %c0_1 = arith.constant 0 : index
    %c0_2 = arith.constant 0 : index
    %8 = vector.load %arg5[%c0, %c0_1, %c0_2] : memref<1x1x256xi32, #tpu.memory_space<vmem>>, vector<1x1x256xi32>
    %9 = vector.shape_cast %8 : vector<1x1x256xi32> to vector<1x256xi32>
    %10 = vector.broadcast %7 : i32 to vector<1x256xi32>
    %11 = arith.subi %9, %10 : vector<1x256xi32>
    %12 = tpu.iota {dimensions = array<i32: 0>} : vector<384x256xi32>
    %13 = vector.broadcast %11 : vector<1x256xi32> to vector<384x256xi32>
    %14 = arith.cmpi eq, %12, %13 : vector<384x256xi32>
    %15 = arith.extui %14 : vector<384x256xi1> to vector<384x256xi32>
    %16 = arith.sitofp %15 : vector<384x256xi32> to vector<384x256xf32>
    %c0_3 = arith.constant 0 : index
    %c0_4 = arith.constant 0 : index
    %c0_5 = arith.constant 0 : index
    %17 = vector.load %arg4[%c0_3, %c0_4, %c0_5] : memref<1x32x384xf32, #tpu.memory_space<vmem>>, vector<1x32x384xf32>
    %18 = vector.shape_cast %17 : vector<1x32x384xf32> to vector<32x384xf32>
    %cst = arith.constant dense<0.000000e+00> : vector<32x256xf32>
    %19 = tpu.matmul %18, %16, %cst {dimension_numbers = #tpu.dot_dimension_numbers<[1], [0], [0], [1], [0, 0, 1, 1], [], []>} : vector<32x384xf32>, vector<384x256xf32>, vector<32x256xf32> -> vector<32x256xf32>
    %c0_6 = arith.constant 0 : index
    %c0_7 = arith.constant 0 : index
    %c0_8 = arith.constant 0 : index
    %20 = vector.load %arg6[%c0_6, %c0_7, %c0_8] : memref<1x4x256xf32, #tpu.memory_space<vmem>>, vector<1x4x256xf32>
    %21 = vector.shape_cast %20 : vector<1x4x256xf32> to vector<4x256xf32>
    %c0_9 = arith.constant 0 : index
    %c0_10 = arith.constant 0 : index
    %22 = vector.load %arg8[%c0_9, %c0_10] : memref<8x256xf32, #tpu.memory_space<vmem>>, vector<8x256xf32>
    %23 = vector.extract_strided_slice %21 {offsets = [0, 0], sizes = [1, 256], strides = [1, 1]} : vector<4x256xf32> to vector<1x256xf32>
    %24 = vector.extract_strided_slice %19 {offsets = [0, 0], sizes = [8, 256], strides = [1, 1]} : vector<32x256xf32> to vector<8x256xf32>
    %25 = vector.broadcast %23 : vector<1x256xf32> to vector<8x256xf32>
    %26 = arith.mulf %25, %24 : vector<8x256xf32>
    %27 = vector.extract_strided_slice %21 {offsets = [1, 0], sizes = [1, 256], strides = [1, 1]} : vector<4x256xf32> to vector<1x256xf32>
    %28 = vector.extract_strided_slice %19 {offsets = [8, 0], sizes = [8, 256], strides = [1, 1]} : vector<32x256xf32> to vector<8x256xf32>
    %29 = vector.broadcast %27 : vector<1x256xf32> to vector<8x256xf32>
    %30 = arith.mulf %29, %28 : vector<8x256xf32>
    %31 = arith.addf %26, %30 : vector<8x256xf32>
    %32 = vector.extract_strided_slice %21 {offsets = [2, 0], sizes = [1, 256], strides = [1, 1]} : vector<4x256xf32> to vector<1x256xf32>
    %33 = vector.extract_strided_slice %19 {offsets = [16, 0], sizes = [8, 256], strides = [1, 1]} : vector<32x256xf32> to vector<8x256xf32>
    %34 = vector.broadcast %32 : vector<1x256xf32> to vector<8x256xf32>
    %35 = arith.mulf %34, %33 : vector<8x256xf32>
    %36 = arith.addf %31, %35 : vector<8x256xf32>
    %37 = vector.extract_strided_slice %21 {offsets = [3, 0], sizes = [1, 256], strides = [1, 1]} : vector<4x256xf32> to vector<1x256xf32>
    %38 = vector.extract_strided_slice %19 {offsets = [24, 0], sizes = [8, 256], strides = [1, 1]} : vector<32x256xf32> to vector<8x256xf32>
    %39 = vector.broadcast %37 : vector<1x256xf32> to vector<8x256xf32>
    %40 = arith.mulf %39, %38 : vector<8x256xf32>
    %41 = arith.addf %36, %40 : vector<8x256xf32>
    %42 = arith.addf %22, %41 : vector<8x256xf32>
    %c0_11 = arith.constant 0 : index
    %c0_12 = arith.constant 0 : index
    %43 = vector.load %arg8[%c0_11, %c0_12] : memref<8x256xf32, #tpu.memory_space<vmem>>, vector<8x256xf32>
    tpu.vector_store %arg8[%c0_11, %c0_12], %42 {strides = array<i32>} : memref<8x256xf32, #tpu.memory_space<vmem>>, vector<8x256xf32>,
    %c0_i32_13 = arith.constant 0 : i32
    %44 = arith.cmpi eq, %arg2, %c0_i32_13 : i32
    %45 = arith.extui %44 : i1 to i32
    %c0_i32_14 = arith.constant 0 : i32
    %46 = arith.cmpi ne, %45, %c0_i32_14 : i32
    scf.if %46 {
      %c0_15 = arith.constant 0 : index
      %c0_16 = arith.constant 0 : index
      %47 = vector.load %arg8[%c0_15, %c0_16] : memref<8x256xf32, #tpu.memory_space<vmem>>, vector<4x256xf32>
      %c0_17 = arith.constant 0 : index
      %c0_18 = arith.constant 0 : index
      %c0_19 = arith.constant 0 : index
      %48 = vector.load %arg7[%c0_17, %c0_18, %c0_19] : memref<1x4x256xf32, #tpu.memory_space<vmem>>, vector<1x4x256xf32>
      %49 = vector.shape_cast %48 : vector<1x4x256xf32> to vector<4x256xf32>
      %50 = vector.shape_cast %47 : vector<4x256xf32> to vector<1x4x256xf32>
      tpu.vector_store %arg7[%c0_17, %c0_18, %c0_19], %50 {strides = array<i32>} : memref<1x4x256xf32, #tpu.memory_space<vmem>>, vector<1x4x256xf32>,
    } else {
    }
    return
  }
  func.func @transform_0(%arg0: i32, %arg1: i32, %arg2: i32, %arg3: memref<2x1xi32, #tpu.memory_space<smem>>) -> (i32, i32, i32) {
    %0 = arith.index_cast %arg0 : i32 to index
    %1 = arith.index_cast %arg1 : i32 to index
    %2 = memref.load %arg3[%0, %1] : memref<2x1xi32, #tpu.memory_space<smem>>
    %3 = arith.addi %arg2, %2 : i32
    %c0_i32 = arith.constant 0 : i32
    %c0_i32_0 = arith.constant 0 : i32
    return %arg0, %c0_i32, %3 : i32, i32, i32
  }
  func.func @transform_1(%arg0: i32, %arg1: i32, %arg2: i32, %arg3: memref<2x1xi32, #tpu.memory_space<smem>>) -> (i32, i32, i32) {
    %c0_i32 = arith.constant 0 : i32
    %c0_i32_0 = arith.constant 0 : i32
    return %arg0, %c0_i32, %arg1 : i32, i32, i32
  }
  func.func @transform_2(%arg0: i32, %arg1: i32, %arg2: i32, %arg3: memref<2x1xi32, #tpu.memory_space<smem>>) -> (i32, i32, i32) {
    %c0_i32 = arith.constant 0 : i32
    %c0_i32_0 = arith.constant 0 : i32
    return %arg0, %c0_i32, %arg1 : i32, i32, i32
  }
  func.func @transform_3(%arg0: i32, %arg1: i32, %arg2: i32, %arg3: memref<2x1xi32, #tpu.memory_space<smem>>) -> (i32, i32, i32) {
    %c0_i32 = arith.constant 0 : i32
    %c0_i32_0 = arith.constant 0 : i32
    return %arg0, %c0_i32, %arg1 : i32, i32, i32
  }
}

</mosaic_0001>

<llo_original>
// kernel: tpu_custom_call.1
$region0: #{tpu_custom_call.1}
  #allocation0 [shape = 'u32[]', space=smem, size = 0x4, offset = 0x4, fixed_abs, tag = 'smem constant byte address 0x4 - core index']
  #allocation1 [shape = 'u32[144,128]{1,0:T(1,128)}', space=vmem, size = 0x12000, scoped, tag = 'internal scratch']
  #allocation2 [shape = 'f32[8,256]{1,0:T(8,128)}', space=vmem, size = 0x2000, scoped, tag = 'scratch operand']
  #allocation3 [shape = 's32[1]{0}', space=sflag, size = 0x4, scoped, tag = 'scoped memory for tpu_custom_call.1']
  #allocation4 [shape = 'u8[1024]{0}', space=smem, size = 0x400, scoped, tag = 'prefetched SMEM operand 0']
  %s0 = inlined_call_operand.vmem [shape: s32[2,1], index: 0, kind: input, shape index: {}]
  %s1 = inlined_call_operand.hbm [shape: f32[2,32,384], index: 1, kind: input, shape index: {}]
  %s2 = inlined_call_operand.vmem [shape: s32[2,1,256], index: 2, kind: input, shape index: {}]
  %s3 = inlined_call_operand.hbm [shape: f32[2,4,256], index: 3, kind: input, shape index: {}]
  %s4 = inlined_call_operand.hbm [shape: f32[2,4,256], index: 4, kind: output, shape index: {}]
  %s5 = sld [smem:[#allocation0]]
  $region61: #{tpu_custom_call.1} parent=0
    _
  %s7 = ssub.s32 1, %s5
  %s8 = scalar_select 0, %s7, %s5
  %s9 = sshll.u32 %s0, 4
  %s10 = int_to_ptr.vmem [resolvable:$true] %s9
  %12 = dma.vmem_to_smem %s10, 32, [#allocation4], [#allocation3]
  %13 = dma.done [#allocation3], 32
  %14 = sfence
  $region1: #{tpu_custom_call.1} parent=0
    #allocation5 [shape = 'u8[98304]{0}', space=vmem, size = 0x18000, scoped, tag = 'input window, operand 1']
    #allocation6 [shape = 's32[2]{0}', space=sflag, size = 0x8, scoped, tag = 'scoped memory for tpu_custom_call.1']
    #allocation7 [shape = 's32[2]{0}', space=sflag, size = 0x8, scoped, tag = 'scoped memory for tpu_custom_call.1']
    #allocation8 [shape = 'u8[8192]{0}', space=vmem, size = 0x2000, scoped, tag = 'input window, operand 3']
    #allocation9 [shape = 's32[2]{0}', space=sflag, size = 0x8, scoped, tag = 'scoped memory for tpu_custom_call.1']
    #allocation10 [shape = 'u8[8192]{0}', space=vmem, size = 0x2000, scoped, tag = 'output window, operand 0']
    %15 = vsyncpa [#allocation6], 0
    %s16 = scalar_lea.sflag [#allocation6], 1
    %17 = vsyncpa %s16, 0
    %18 = vsyncpa [#allocation9], 0
    %s19 = scalar_lea.sflag [#allocation9], 1
    %20 = vsyncpa %s19, 0
    %21 = vsyncpa [#allocation7], 0
    %s22 = scalar_lea.sflag [#allocation7], 1
    %23 = vsyncpa %s22, 0
    loop: start=0, step=1, limit=4
    $region2: #{tpu_custom_call.1} parent=1 // loop_pre_header
      _
    $region3: #{tpu_custom_call.1} parent=1 // loop_header
      %s25 = sphi 0, %s29
      %p26 = scmp.ge.s32.totalorder %s25, 4
      %s32 = sphi 0, %s51
      %s33 = sphi 0, %s47
      %s34 = sphi 0, %s43
      %s35 = sphi 0, %s32
      %s36 = sphi 0, %s33
      %s37 = sphi 0, %s34
      %s38 = sphi 0, %s35
      %s39 = sphi 0, %s36
      %s40 = sphi 0, %s37
      %s74 = sphi 0, %s76
      %s77 = sphi 0, %s74
      %s78 = sphi 0, %s77
      %s94 = sphi 0, %s78
      %s102 = sphi 0, %s104
      %s105 = sphi 0, %s102
      %s106 = sphi 0, %s105
      %s122 = sphi 0, %s106
      %s130 = sphi 0, %s132
      %s133 = sphi 0, %s130
      %s134 = sphi 0, %s133
      %s150 = sphi 0, %s134
      %s158 = sphi 0, %s160
      %s161 = sphi 0, %s158
      %s162 = sphi 0, %s161
      %s178 = sphi 0, %s162
    $region4: #{tpu_custom_call.1} parent=1 // loop_header_branch
      %28 = sbr.rel (%p26) target = $region8
    $region5: #{tpu_custom_call.1} parent=1 // loop_body
      %s30 = ssub.s32 %s25, 1
      %s31 = ssub.s32 %s25, 2
      %s41 = sadd.s32 1, %s34
      %p42 = scmp.ge.s32.totalorder %s41, 1
      %s43 = scalar_select %p42, 0, %s41
      %s44 = sadd.s32 1, %s33
      %s45 = scalar_select %p42, %s44, %s33
      %p46 = scmp.ge.s32.totalorder %s45, 1
      %s47 = scalar_select %p46, 0, %s45
      %s48 = sadd.s32 1, %s32
      %s49 = scalar_select %p46, %s48, %s32
      %p50 = scmp.ge.s32.totalorder %s49, 2
      %s51 = scalar_select %p50, 0, %s49
      %s52 = sshra.s32 %s33, 7
      %s53 = sand.u32 %s33, 127
      %s54 = sadd.s32 %s52, %s32
      %s55 = smul.u32 %s54, 128
      %s56 = sshra.s32 %s33, 7
      %s57 = sand.u32 %s33, 127
      %s58 = sadd.s32 %s55, %s57
      %s59 = sld [smem:[#allocation4 + %s58]]
      %s60 = sadd.s32 %s34, %s59
      %s61 = sshra.s32 %s47, 7
      %s62 = sand.u32 %s47, 127
      %s63 = sadd.s32 %s61, %s51
      %s64 = smul.u32 %s63, 128
      %s65 = sshra.s32 %s47, 7
      %s66 = sand.u32 %s47, 127
      %s67 = sadd.s32 %s64, %s66
      %s68 = sld [smem:[#allocation4 + %s67]]
      %s69 = sadd.s32 %s43, %s68
      %s70 = ssub.s32 %s32, %s51
      %s71 = ssub.s32 %s60, %s69
      %s72 = sor.u32 %s70, %s71
      %p73 = scmp.eq.s32.totalorder %s72, 0
      %s75 = sadd.s32 %s74, 1
      %s76 = scalar_select %p73, %s74, %s75
      %p79 = pneg %p73
      %p80 = scmp.eq.s32.totalorder %s25, 1
      %p81 = por %p79, %p80
      %p82 = scmp.ne.s32.totalorder %s74, %s77
      %p83 = scmp.eq.s32.totalorder %s25, 0
      %p84 = por %p82, %p83
      %p85 = scmp.ne.s32.totalorder %s74, %s77
      %p86 = scmp.eq.s32.totalorder %s30, 1
      %p87 = por %p85, %p86
      %p88 = scmp.ne.s32.totalorder %s77, %s78
      %p89 = scmp.eq.s32.totalorder %s30, 0
      %p90 = por %p88, %p89
      %p91 = scmp.ne.s32.totalorder %s77, %s78
      %p92 = scmp.eq.s32.totalorder %s31, 1
      %p93 = por %p91, %p92
      %p95 = scmp.ne.s32.totalorder %s78, %s94
      %p96 = scmp.eq.s32.totalorder %s31, 0
      %p97 = por %p95, %p96
      %s98 = ssub.s32 %s32, %s51
      %s99 = ssub.s32 %s33, %s47
      %s100 = sor.u32 %s98, %s99
      %p101 = scmp.eq.s32.totalorder %s100, 0
      %s103 = sadd.s32 %s102, 1
      %s104 = scalar_select %p101, %s102, %s103
      %p107 = pneg %p101
      %p108 = scmp.eq.s32.totalorder %s25, 1
      %p109 = por %p107, %p108
      %p110 = scmp.ne.s32.totalorder %s102, %s105
      %p111 = scmp.eq.s32.totalorder %s25, 0
      %p112 = por %p110, %p111
      %p113 = scmp.ne.s32.totalorder %s102, %s105
      %p114 = scmp.eq.s32.totalorder %s30, 1
      %p115 = por %p113, %p114
      %p116 = scmp.ne.s32.totalorder %s105, %s106
      %p117 = scmp.eq.s32.totalorder %s30, 0
      %p118 = por %p116, %p117
      %p119 = scmp.ne.s32.totalorder %s105, %s106
      %p120 = scmp.eq.s32.totalorder %s31, 1
      %p121 = por %p119, %p120
      %p123 = scmp.ne.s32.totalorder %s106, %s122
      %p124 = scmp.eq.s32.totalorder %s31, 0
      %p125 = por %p123, %p124
      %s126 = ssub.s32 %s32, %s51
      %s127 = ssub.s32 %s33, %s47
      %s128 = sor.u32 %s126, %s127
      %p129 = scmp.eq.s32.totalorder %s128, 0
      %s131 = sadd.s32 %s130, 1
      %s132 = scalar_select %p129, %s130, %s131
      %p135 = pneg %p129
      %p136 = scmp.eq.s32.totalorder %s25, 1
      %p137 = por %p135, %p136
      %p138 = scmp.ne.s32.totalorder %s130, %s133
      %p139 = scmp.eq.s32.totalorder %s25, 0
      %p140 = por %p138, %p139
      %p141 = scmp.ne.s32.totalorder %s130, %s133
      %p142 = scmp.eq.s32.totalorder %s30, 1
      %p143 = por %p141, %p142
      %p144 = scmp.ne.s32.totalorder %s133, %s134
      %p145 = scmp.eq.s32.totalorder %s30, 0
      %p146 = por %p144, %p145
      %p147 = scmp.ne.s32.totalorder %s133, %s134
      %p148 = scmp.eq.s32.totalorder %s31, 1
      %p149 = por %p147, %p148
      %p151 = scmp.ne.s32.totalorder %s134, %s150
      %p152 = scmp.eq.s32.totalorder %s31, 0
      %p153 = por %p151, %p152
      %s154 = ssub.s32 %s32, %s51
      %s155 = ssub.s32 %s33, %s47
      %s156 = sor.u32 %s154, %s155
      %p157 = scmp.eq.s32.totalorder %s156, 0
      %s159 = sadd.s32 %s158, 1
      %s160 = scalar_select %p157, %s158, %s159
      %p163 = pneg %p157
      %p164 = scmp.eq.s32.totalorder %s25, 1
      %p165 = por %p163, %p164
      %p166 = scmp.ne.s32.totalorder %s158, %s161
      %p167 = scmp.eq.s32.totalorder %s25, 0
      %p168 = por %p166, %p167
      %p169 = scmp.ne.s32.totalorder %s158, %s161
      %p170 = scmp.eq.s32.totalorder %s30, 1
      %p171 = por %p169, %p170
      %p172 = scmp.ne.s32.totalorder %s161, %s162
      %p173 = scmp.eq.s32.totalorder %s30, 0
      %p174 = por %p172, %p173
      %p175 = scmp.ne.s32.totalorder %s161, %s162
      %p176 = scmp.eq.s32.totalorder %s31, 1
      %p177 = por %p175, %p176
      %p179 = scmp.ne.s32.totalorder %s162, %s178
      %p180 = scmp.eq.s32.totalorder %s31, 0
      %p181 = por %p179, %p180
      %p182 = scmp.le.s32.totalorder 1, %s25
      %p183 = scmp.lt.s32.totalorder %s25, 3
      %p184 = pnand %p182, %p183
      %p185 = pneg %p184
      // Predicated region
      $region9: #{tpu_custom_call.1} parent=5 // pred_check
        _
      $region10: #{tpu_custom_call.1} parent=5 // pred_check_branch
        %187 = sbr.rel (%p184) target = $region12
      $region11: #{tpu_custom_call.1} parent=5 // pred_region
        %s188 = ssub.s32 %s25, 1
      $region12: #{tpu_custom_call.1} parent=5 // pred_fallthru
        _
      %p189 = scmp.lt.s32.totalorder %s25, 2
      // Predicated region
      $region13: #{tpu_custom_call.1} parent=5 // pred_check
        %p190 = pneg %p189
      $region14: #{tpu_custom_call.1} parent=5 // pred_check_branch
        %192 = sbr.rel (%p190) target = $region16
      $region15: #{tpu_custom_call.1} parent=5 // pred_region
        // Predicated region
        $region17: #{tpu_custom_call.1} parent=15 // pred_check
          %p193 = pneg %p84
        $region18: #{tpu_custom_call.1} parent=15 // pred_check_branch
          %195 = sbr.rel (%p193) target = $region20
        $region19: #{tpu_custom_call.1} parent=15 // pred_region
          %s196 = sand.u32 %s74, 1
          %s197 = scalar_lea.sflag [#allocation6], %s196
          %s198 = sand.u32 %s74, 1
          %s199 = smul.addr %s198, 96
          %s200 = scalar_lea.vmem [#allocation5], %s199
          %s201 = sshra.s32 %s33, 7
          %s202 = sand.u32 %s33, 127
          %s203 = sadd.s32 %s201, %s32
          %s204 = smul.u32 %s203, 128
          %s205 = sshra.s32 %s33, 7
          %s206 = sand.u32 %s33, 127
          %s207 = sadd.s32 %s204, %s206
          %s208 = sld [smem:[#allocation4 + %s207]]
          %s209 = sadd.s32 %s34, %s208
          %s210 = smul.u32 3, %s209
          %s212 = ssub.s32 1536, 1536
          %213 = vsyncadd %s197, %s212
          %s214 = smul.addr %s32, 12
          %s215 = sadd.s32 %s210, %s214
          %s216 = smul.addr %s215, 128
          %s217 = scalar_lea.hbm %s1, %s216
          %s218 = sshll.u32 %s200, 4
          %s219 = int_to_ptr.vmem [resolvable:$true] %s218
          %224 = dma.hbm_to_vmem [thread:$0]  %s217, 1536, %s219, %s197, 384, 384, 24
        $region20: #{tpu_custom_call.1} parent=15 // pred_fallthru
          _
        // Predicated region
        $region21: #{tpu_custom_call.1} parent=15 // pred_check
          %p225 = pneg %p112
        $region22: #{tpu_custom_call.1} parent=15 // pred_check_branch
          %227 = sbr.rel (%p225) target = $region24
        $region23: #{tpu_custom_call.1} parent=15 // pred_region
          %s228 = smul.u32 2, %s33
          %p229 = scmp.lt.s32.totalorder %s32, 1
          %s230 = scalar_select %p229, %s32, 1
          %p231 = scmp.lt.s32.totalorder %s228, 1
          %s232 = scalar_select %p231, %s228, 1
          %s233 = smul.addr %s230, 2
          %s234 = sadd.s32 %s232, %s233
          %s235 = scalar_lea.vmem %s2, %s234
          %s236 = smul.u32 2, %s33
        $region24: #{tpu_custom_call.1} parent=15 // pred_fallthru
          _
        // Predicated region
        $region25: #{tpu_custom_call.1} parent=15 // pred_check
          %p237 = pneg %p140
        $region26: #{tpu_custom_call.1} parent=15 // pred_check_branch
          %239 = sbr.rel (%p237) target = $region28
        $region27: #{tpu_custom_call.1} parent=15 // pred_region
          %s240 = sand.u32 %s130, 1
          %s241 = scalar_lea.sflag [#allocation9], %s240
          %s242 = sand.u32 %s130, 1
          %s243 = smul.addr %s242, 8
          %s244 = scalar_lea.vmem [#allocation8], %s243
          %s245 = smul.u32 2, %s33
          %s247 = ssub.s32 128, 128
          %248 = vsyncadd %s241, %s247
          %s249 = smul.addr %s32, 2
          %s250 = sadd.s32 %s245, %s249
          %s251 = smul.addr %s250, 64
          %s252 = scalar_lea.hbm %s3, %s251
          %s254 = sshll.u32 %s244, 4
          %s255 = int_to_ptr.vmem [resolvable:$true] %s254
          %257 = dma.hbm_to_vmem [thread:$0]  %s252, 128, %s255, %s241
        $region28: #{tpu_custom_call.1} parent=15 // pred_fallthru
          _
      $region16: #{tpu_custom_call.1} parent=5 // pred_fallthru
        _
      %p258 = scmp.le.s32.totalorder 1, %s25
      %p259 = scmp.lt.s32.totalorder %s25, 3
      %p260 = pnand %p258, %p259
      %p261 = pneg %p260
      // Predicated region
      $region29: #{tpu_custom_call.1} parent=5 // pred_check
        _
      $region30: #{tpu_custom_call.1} parent=5 // pred_check_branch
        %263 = sbr.rel (%p260) target = $region32
      $region31: #{tpu_custom_call.1} parent=5 // pred_region
        %s264 = ssub.s32 %s25, 1
        %s265 = sand.u32 %s77, 1
        %s266 = scalar_lea.sflag [#allocation6], %s265
        %s267 = sand.u32 %s77, 1
        %s268 = smul.addr %s267, 96
        %s269 = scalar_lea.vmem [#allocation5], %s268
        // Predicated region
        $region33: #{tpu_custom_call.1} parent=31 // pred_check
          %p270 = pneg %p90
        $region34: #{tpu_custom_call.1} parent=31 // pred_check_branch
          %272 = sbr.rel (%p270) target = $region36
        $region35: #{tpu_custom_call.1} parent=31 // pred_region
          %273 = dma.done %s266, 1536
        $region36: #{tpu_custom_call.1} parent=31 // pred_fallthru
          _
        %s274 = sand.u32 %s133, 1
        %s275 = scalar_lea.sflag [#allocation9], %s274
        %s276 = sand.u32 %s133, 1
        %s277 = smul.addr %s276, 8
        %s278 = scalar_lea.vmem [#allocation8], %s277
        // Predicated region
        $region37: #{tpu_custom_call.1} parent=31 // pred_check
          %p279 = pneg %p146
        $region38: #{tpu_custom_call.1} parent=31 // pred_check_branch
          %281 = sbr.rel (%p279) target = $region40
        $region39: #{tpu_custom_call.1} parent=31 // pred_region
          %282 = dma.done %s275, 128
        $region40: #{tpu_custom_call.1} parent=31 // pred_fallthru
          _
        %s283 = sand.u32 %s77, 1
        %s284 = scalar_lea.sflag [#allocation6], %s283
        %s285 = sand.u32 %s77, 1
        %s286 = smul.addr %s285, 96
        %s287 = scalar_lea.vmem [#allocation5], %s286
        %p288 = pneg %p90
        %p289 = pneg %p87
        %s290 = smul.u32 2, %s36
        %p291 = scmp.lt.s32.totalorder %s35, 1
        %s292 = scalar_select %p291, %s35, 1
        %p293 = scmp.lt.s32.totalorder %s290, 1
        %s294 = scalar_select %p293, %s290, 1
        %s295 = smul.addr %s292, 2
        %s296 = sadd.s32 %s294, %s295
        %s297 = scalar_lea.vmem %s2, %s296
        %p298 = pneg %p118
        %p299 = pneg %p115
        %s300 = sand.u32 %s133, 1
        %s301 = scalar_lea.sflag [#allocation9], %s300
        %s302 = sand.u32 %s133, 1
        %s303 = smul.addr %s302, 8
        %s304 = scalar_lea.vmem [#allocation8], %s303
        %p305 = pneg %p146
        %p306 = pneg %p143
        %p307 = pneg %p174
        %p308 = pneg %p171
        %s309 = sand.u32 %s161, 1
        %s310 = scalar_lea.sflag [#allocation7], %s309
        %s311 = sand.u32 %s161, 1
        %s312 = smul.addr %s311, 8
        %s313 = scalar_lea.vmem [#allocation10], %s312
        %s314 = sshra.s32 %s36, 7
        %s315 = sand.u32 %s36, 127
        %s316 = sadd.s32 %s314, %s35
        %s317 = smul.u32 %s316, 128
        %s318 = sshra.s32 %s36, 7
        %s319 = sand.u32 %s36, 127
        %s320 = sadd.s32 %s317, %s319
        %s321 = sld [smem:[#allocation4 + %s320]]
        %s322 = sadd.s32 %s37, %s321
        %s323 = smul.u32 3, %s322
        %s324 = smul.u32 2, %s36
        %p325 = scmp.lt.s32.totalorder %s35, 1
        %s326 = scalar_select %p325, %s35, 1
        %p327 = scmp.lt.s32.totalorder %s324, 1
        %s328 = scalar_select %p327, %s324, 1
        %s329 = smul.addr %s326, 2
        %s330 = sadd.s32 %s328, %s329
        %s331 = scalar_lea.vmem %s2, %s330
        %s332 = smul.u32 2, %s36
        %s333 = smul.u32 2, %s36
        %s334 = smul.u32 2, %s36
        %p335 = scmp.eq.s32.totalorder %s37, 0
        // Predicated region
        $region41: #{tpu_custom_call.1} parent=31 // pred_check
          %p336 = pneg %p335
        $region42: #{tpu_custom_call.1} parent=31 // pred_check_branch
          %338 = sbr.rel (%p336) target = $region44
        $region43: #{tpu_custom_call.1} parent=31 // pred_region
          %339 = vst [vmem:[#allocation2] sm:$0xff] 0.0
          %340 = vst [vmem:[#allocation2 + $0x8] sm:$0xff] 0.0
        $region44: #{tpu_custom_call.1} parent=31 // pred_fallthru
          _
        %s341 = sshra.s32 %s36, 7
        %s342 = sand.u32 %s36, 127
        %s343 = sadd.s32 %s341, %s35
        %s344 = smul.u32 %s343, 128
        %s345 = sshra.s32 %s36, 7
        %s346 = sand.u32 %s36, 127
        %s347 = sadd.s32 %s344, %s346
        %s348 = sld [smem:[#allocation4 + %s347]]
        %s349 = sadd.s32 %s37, %s348
        %s350 = smul.u32 %s349, 384
        %v351 = vld [vmem:[%s331] sm:$0x3]
        %v352 = vstv %s350
        %v353 = vsub.s32 %v351, %v352
        %v354 = vlaneseq
        %v355 = vshrl.u32 %v354, 7
        %v356 = vadd.s32 %v355, 8
        %v357 = vadd.s32 %v355, 16
        %v358 = vadd.s32 %v355, 24
        %v359 = vadd.s32 %v355, 32
        %v360 = vadd.s32 %v355, 40
        %v361 = vadd.s32 %v355, 48
        %v362 = vadd.s32 %v355, 56
        %v363 = vadd.s32 %v355, 64
        %v364 = vadd.s32 %v355, 72
        %v365 = vadd.s32 %v355, 80
        %v366 = vadd.s32 %v355, 88
        %v367 = vadd.s32 %v355, 96
        %v368 = vadd.s32 %v355, 104
        %v369 = vadd.s32 %v355, 112
        %v370 = vadd.s32 %v355, 120
        %v371 = vadd.s32 %v355, 128
        %v372 = vadd.s32 %v355, 136
        %v373 = vadd.s32 %v355, 144
        %v374 = vadd.s32 %v355, 152
        %v375 = vadd.s32 %v355, 160
        %v376 = vadd.s32 %v355, 168
        %v377 = vadd.s32 %v355, 176
        %v378 = vadd.s32 %v355, 184
        %v379 = vadd.s32 %v355, 192
        %v380 = vadd.s32 %v355, 200
        %v381 = vadd.s32 %v355, 208
        %v382 = vadd.s32 %v355, 216
        %v383 = vadd.s32 %v355, 224
        %v384 = vadd.s32 %v355, 232
        %v385 = vadd.s32 %v355, 240
        %v386 = vadd.s32 %v355, 248
        %v387 = vadd.s32 %v355, 256
        %v388 = vadd.s32 %v355, 264
        %v389 = vadd.s32 %v355, 272
        %v390 = vadd.s32 %v355, 280
        %v391 = vadd.s32 %v355, 288
        %v392 = vadd.s32 %v355, 296
        %v393 = vadd.s32 %v355, 304
        %v394 = vadd.s32 %v355, 312
        %v395 = vadd.s32 %v355, 320
        %v396 = vadd.s32 %v355, 328
        %v397 = vadd.s32 %v355, 336
        %v398 = vadd.s32 %v355, 344
        %v399 = vadd.s32 %v355, 352
        %v400 = vadd.s32 %v355, 360
        %v401 = vadd.s32 %v355, 368
        %v402 = vadd.s32 %v355, 376
        %v403 = vlaneseq
        %v404 = vshrl.u32 %v403, 7
        %v405 = vsub.s32 0, %v404
        %v406 = vrot.slane %v353, %v405
        %v407 = vlaneseq
        %v408 = vshrl.u32 %v407, 7
        %v409 = vsub.s32 1, %v408
        %v410 = vrot.slane %v353, %v409
        %vm411 = vcmp.eq.s32.totalorder %v355, %v406
        %vm412 = vcmp.eq.s32.totalorder %v355, %v410
        %vm413 = vcmp.eq.s32.totalorder %v356, %v406
        %vm414 = vcmp.eq.s32.totalorder %v356, %v410
        %vm415 = vcmp.eq.s32.totalorder %v357, %v406
        %vm416 = vcmp.eq.s32.totalorder %v357, %v410
        %vm417 = vcmp.eq.s32.totalorder %v358, %v406
        %vm418 = vcmp.eq.s32.totalorder %v358, %v410
        %vm419 = vcmp.eq.s32.totalorder %v359, %v406
        %vm420 = vcmp.eq.s32.totalorder %v359, %v410
        %vm421 = vcmp.eq.s32.totalorder %v360, %v406
        %vm422 = vcmp.eq.s32.totalorder %v360, %v410
        %vm423 = vcmp.eq.s32.totalorder %v361, %v406
        %vm424 = vcmp.eq.s32.totalorder %v361, %v410
        %vm425 = vcmp.eq.s32.totalorder %v362, %v406
        %vm426 = vcmp.eq.s32.totalorder %v362, %v410
        %vm427 = vcmp.eq.s32.totalorder %v363, %v406
        %vm428 = vcmp.eq.s32.totalorder %v363, %v410
        %vm429 = vcmp.eq.s32.totalorder %v364, %v406
        %vm430 = vcmp.eq.s32.totalorder %v364, %v410
        %vm431 = vcmp.eq.s32.totalorder %v365, %v406
        %vm432 = vcmp.eq.s32.totalorder %v365, %v410
        %vm433 = vcmp.eq.s32.totalorder %v366, %v406
        %vm434 = vcmp.eq.s32.totalorder %v366, %v410
        %vm435 = vcmp.eq.s32.totalorder %v367, %v406
        %vm436 = vcmp.eq.s32.totalorder %v367, %v410
        %vm437 = vcmp.eq.s32.totalorder %v368, %v406
        %vm438 = vcmp.eq.s32.totalorder %v368, %v410
        %vm439 = vcmp.eq.s32.totalorder %v369, %v406
        %vm440 = vcmp.eq.s32.totalorder %v369, %v410
        %vm441 = vcmp.eq.s32.totalorder %v370, %v406
        %vm442 = vcmp.eq.s32.totalorder %v370, %v410
        %vm443 = vcmp.eq.s32.totalorder %v371, %v406
        %vm444 = vcmp.eq.s32.totalorder %v371, %v410
        %vm445 = vcmp.eq.s32.totalorder %v372, %v406
        %vm446 = vcmp.eq.s32.totalorder %v372, %v410
        %vm447 = vcmp.eq.s32.totalorder %v373, %v406
        %vm448 = vcmp.eq.s32.totalorder %v373, %v410
        %vm449 = vcmp.eq.s32.totalorder %v374, %v406
        %vm450 = vcmp.eq.s32.totalorder %v374, %v410
        %vm451 = vcmp.eq.s32.totalorder %v375, %v406
        %vm452 = vcmp.eq.s32.totalorder %v375, %v410
        %vm453 = vcmp.eq.s32.totalorder %v376, %v406
        %vm454 = vcmp.eq.s32.totalorder %v376, %v410
        %vm455 = vcmp.eq.s32.totalorder %v377, %v406
        %vm456 = vcmp.eq.s32.totalorder %v377, %v410
        %vm457 = vcmp.eq.s32.totalorder %v378, %v406
        %vm458 = vcmp.eq.s32.totalorder %v378, %v410
        %vm459 = vcmp.eq.s32.totalorder %v379, %v406
        %vm460 = vcmp.eq.s32.totalorder %v379, %v410
        %vm461 = vcmp.eq.s32.totalorder %v380, %v406
        %vm462 = vcmp.eq.s32.totalorder %v380, %v410
        %vm463 = vcmp.eq.s32.totalorder %v381, %v406
        %vm464 = vcmp.eq.s32.totalorder %v381, %v410
        %vm465 = vcmp.eq.s32.totalorder %v382, %v406
        %vm466 = vcmp.eq.s32.totalorder %v382, %v410
        %vm467 = vcmp.eq.s32.totalorder %v383, %v406
        %vm468 = vcmp.eq.s32.totalorder %v383, %v410
        %vm469 = vcmp.eq.s32.totalorder %v384, %v406
        %vm470 = vcmp.eq.s32.totalorder %v384, %v410
        %vm471 = vcmp.eq.s32.totalorder %v385, %v406
        %vm472 = vcmp.eq.s32.totalorder %v385, %v410
        %vm473 = vcmp.eq.s32.totalorder %v386, %v406
        %vm474 = vcmp.eq.s32.totalorder %v386, %v410
        %vm475 = vcmp.eq.s32.totalorder %v387, %v406
        %vm476 = vcmp.eq.s32.totalorder %v387, %v410
        %vm477 = vcmp.eq.s32.totalorder %v388, %v406
        %vm478 = vcmp.eq.s32.totalorder %v388, %v410
        %vm479 = vcmp.eq.s32.totalorder %v389, %v406
        %vm480 = vcmp.eq.s32.totalorder %v389, %v410
        %vm481 = vcmp.eq.s32.totalorder %v390, %v406
        %vm482 = vcmp.eq.s32.totalorder %v390, %v410
        %vm483 = vcmp.eq.s32.totalorder %v391, %v406
        %vm484 = vcmp.eq.s32.totalorder %v391, %v410
        %vm485 = vcmp.eq.s32.totalorder %v392, %v406
        %vm486 = vcmp.eq.s32.totalorder %v392, %v410
        %vm487 = vcmp.eq.s32.totalorder %v393, %v406
        %vm488 = vcmp.eq.s32.totalorder %v393, %v410
        %vm489 = vcmp.eq.s32.totalorder %v394, %v406
        %vm490 = vcmp.eq.s32.totalorder %v394, %v410
        %vm491 = vcmp.eq.s32.totalorder %v395, %v406
        %vm492 = vcmp.eq.s32.totalorder %v395, %v410
        %vm493 = vcmp.eq.s32.totalorder %v396, %v406
        %vm494 = vcmp.eq.s32.totalorder %v396, %v410
        %vm495 = vcmp.eq.s32.totalorder %v397, %v406
        %vm496 = vcmp.eq.s32.totalorder %v397, %v410
        %vm497 = vcmp.eq.s32.totalorder %v398, %v406
        %vm498 = vcmp.eq.s32.totalorder %v398, %v410
        %vm499 = vcmp.eq.s32.totalorder %v399, %v406
        %vm500 = vcmp.eq.s32.totalorder %v399, %v410
        %vm501 = vcmp.eq.s32.totalorder %v400, %v406
        %vm502 = vcmp.eq.s32.totalorder %v400, %v410
        %vm503 = vcmp.eq.s32.totalorder %v401, %v406
        %vm504 = vcmp.eq.s32.totalorder %v401, %v410
        %vm505 = vcmp.eq.s32.totalorder %v402, %v406
        %vm506 = vcmp.eq.s32.totalorder %v402, %v410
        %v507 = vsel %vm411, 1, 0
        %v508 = vsel %vm412, 1, 0
        %v509 = vsel %vm413, 1, 0
        %v510 = vsel %vm414, 1, 0
        %v511 = vsel %vm415, 1, 0
        %v512 = vsel %vm416, 1, 0
        %v513 = vsel %vm417, 1, 0
        %v514 = vsel %vm418, 1, 0
        %v515 = vsel %vm419, 1, 0
        %v516 = vsel %vm420, 1, 0
        %v517 = vsel %vm421, 1, 0
        %v518 = vsel %vm422, 1, 0
        %v519 = vsel %vm423, 1, 0
        %v520 = vsel %vm424, 1, 0
        %v521 = vsel %vm425, 1, 0
        %v522 = vsel %vm426, 1, 0
        %v523 = vsel %vm427, 1, 0
        %v524 = vsel %vm428, 1, 0
        %v525 = vsel %vm429, 1, 0
        %v526 = vsel %vm430, 1, 0
        %v527 = vsel %vm431, 1, 0
        %v528 = vsel %vm432, 1, 0
        %v529 = vsel %vm433, 1, 0
        %v530 = vsel %vm434, 1, 0
        %v531 = vsel %vm435, 1, 0
        %v532 = vsel %vm436, 1, 0
        %v533 = vsel %vm437, 1, 0
        %v534 = vsel %vm438, 1, 0
        %v535 = vsel %vm439, 1, 0
        %v536 = vsel %vm440, 1, 0
        %v537 = vsel %vm441, 1, 0
        %v538 = vsel %vm442, 1, 0
        %v539 = vsel %vm443, 1, 0
        %v540 = vsel %vm444, 1, 0
        %v541 = vsel %vm445, 1, 0
        %v542 = vsel %vm446, 1, 0
        %v543 = vsel %vm447, 1, 0
        %v544 = vsel %vm448, 1, 0
        %v545 = vsel %vm449, 1, 0
        %v546 = vsel %vm450, 1, 0
        %v547 = vsel %vm451, 1, 0
        %v548 = vsel %vm452, 1, 0
        %v549 = vsel %vm453, 1, 0
        %v550 = vsel %vm454, 1, 0
        %v551 = vsel %vm455, 1, 0
        %v552 = vsel %vm456, 1, 0
        %v553 = vsel %vm457, 1, 0
        %v554 = vsel %vm458, 1, 0
        %v555 = vsel %vm459, 1, 0
        %v556 = vsel %vm460, 1, 0
        %v557 = vsel %vm461, 1, 0
        %v558 = vsel %vm462, 1, 0
        %v559 = vsel %vm463, 1, 0
        %v560 = vsel %vm464, 1, 0
        %v561 = vsel %vm465, 1, 0
        %v562 = vsel %vm466, 1, 0
        %v563 = vsel %vm467, 1, 0
        %v564 = vsel %vm468, 1, 0
        %v565 = vsel %vm469, 1, 0
        %v566 = vsel %vm470, 1, 0
        %v567 = vsel %vm471, 1, 0
        %v568 = vsel %vm472, 1, 0
        %v569 = vsel %vm473, 1, 0
        %v570 = vsel %vm474, 1, 0
        %v571 = vsel %vm475, 1, 0
        %v572 = vsel %vm476, 1, 0
        %v573 = vsel %vm477, 1, 0
        %v574 = vsel %vm478, 1, 0
        %v575 = vsel %vm479, 1, 0
        %v576 = vsel %vm480, 1, 0
        %v577 = vsel %vm481, 1, 0
        %v578 = vsel %vm482, 1, 0
        %v579 = vsel %vm483, 1, 0
        %v580 = vsel %vm484, 1, 0
        %v581 = vsel %vm485, 1, 0
        %v582 = vsel %vm486, 1, 0
        %v583 = vsel %vm487, 1, 0
        %v584 = vsel %vm488, 1, 0
        %v585 = vsel %vm489, 1, 0
        %v586 = vsel %vm490, 1, 0
        %v587 = vsel %vm491, 1, 0
        %v588 = vsel %vm492, 1, 0
        %v589 = vsel %vm493, 1, 0
        %v590 = vsel %vm494, 1, 0
        %v591 = vsel %vm495, 1, 0
        %v592 = vsel %vm496, 1, 0
        %v593 = vsel %vm497, 1, 0
        %v594 = vsel %vm498, 1, 0
        %v595 = vsel %vm499, 1, 0
        %v596 = vsel %vm500, 1, 0
        %v597 = vsel %vm501, 1, 0
        %v598 = vsel %vm502, 1, 0
        %v599 = vsel %vm503, 1, 0
        %v600 = vsel %vm504, 1, 0
        %v601 = vsel %vm505, 1, 0
        %v602 = vsel %vm506, 1, 0
        %v603 = vcvt.s32.f32 %v507
        %v604 = vcvt.s32.f32 %v508
        %v605 = vcvt.s32.f32 %v509
        %v606 = vcvt.s32.f32 %v510
        %v607 = vcvt.s32.f32 %v511
        %v608 = vcvt.s32.f32 %v512
        %v609 = vcvt.s32.f32 %v513
        %v610 = vcvt.s32.f32 %v514
        %v611 = vcvt.s32.f32 %v515
        %v612 = vcvt.s32.f32 %v516
        %v613 = vcvt.s32.f32 %v517
        %v614 = vcvt.s32.f32 %v518
        %v615 = vcvt.s32.f32 %v519
        %v616 = vcvt.s32.f32 %v520
        %v617 = vcvt.s32.f32 %v521
        %v618 = vcvt.s32.f32 %v522
        %v619 = vcvt.s32.f32 %v523
        %v620 = vcvt.s32.f32 %v524
        %v621 = vcvt.s32.f32 %v525
        %v622 = vcvt.s32.f32 %v526
        %v623 = vcvt.s32.f32 %v527
        %v624 = vcvt.s32.f32 %v528
        %v625 = vcvt.s32.f32 %v529
        %v626 = vcvt.s32.f32 %v530
        %v627 = vcvt.s32.f32 %v531
        %v628 = vcvt.s32.f32 %v532
        %v629 = vcvt.s32.f32 %v533
        %v630 = vcvt.s32.f32 %v534
        %v631 = vcvt.s32.f32 %v535
        %v632 = vcvt.s32.f32 %v536
        %v633 = vcvt.s32.f32 %v537
        %v634 = vcvt.s32.f32 %v538
        %v635 = vcvt.s32.f32 %v539
        %v636 = vcvt.s32.f32 %v540
        %v637 = vcvt.s32.f32 %v541
        %v638 = vcvt.s32.f32 %v542
        %v639 = vcvt.s32.f32 %v543
        %v640 = vcvt.s32.f32 %v544
        %v641 = vcvt.s32.f32 %v545
        %v642 = vcvt.s32.f32 %v546
        %v643 = vcvt.s32.f32 %v547
        %v644 = vcvt.s32.f32 %v548
        %v645 = vcvt.s32.f32 %v549
        %v646 = vcvt.s32.f32 %v550
        %v647 = vcvt.s32.f32 %v551
        %v648 = vcvt.s32.f32 %v552
        %v649 = vcvt.s32.f32 %v553
        %v650 = vcvt.s32.f32 %v554
        %v651 = vcvt.s32.f32 %v555
        %v652 = vcvt.s32.f32 %v556
        %v653 = vcvt.s32.f32 %v557
        %v654 = vcvt.s32.f32 %v558
        %v655 = vcvt.s32.f32 %v559
        %v656 = vcvt.s32.f32 %v560
        %v657 = vcvt.s32.f32 %v561
        %v658 = vcvt.s32.f32 %v562
        %v659 = vcvt.s32.f32 %v563
        %v660 = vcvt.s32.f32 %v564
        %v661 = vcvt.s32.f32 %v565
        %v662 = vcvt.s32.f32 %v566
        %v663 = vcvt.s32.f32 %v567
        %v664 = vcvt.s32.f32 %v568
        %v665 = vcvt.s32.f32 %v569
        %v666 = vcvt.s32.f32 %v570
        %v667 = vcvt.s32.f32 %v571
        %v668 = vcvt.s32.f32 %v572
        %v669 = vcvt.s32.f32 %v573
        %v670 = vcvt.s32.f32 %v574
        %v671 = vcvt.s32.f32 %v575
        %v672 = vcvt.s32.f32 %v576
        %v673 = vcvt.s32.f32 %v577
        %v674 = vcvt.s32.f32 %v578
        %v675 = vcvt.s32.f32 %v579
        %v676 = vcvt.s32.f32 %v580
        %v677 = vcvt.s32.f32 %v581
        %v678 = vcvt.s32.f32 %v582
        %v679 = vcvt.s32.f32 %v583
        %v680 = vcvt.s32.f32 %v584
        %v681 = vcvt.s32.f32 %v585
        %v682 = vcvt.s32.f32 %v586
        %v683 = vcvt.s32.f32 %v587
        %v684 = vcvt.s32.f32 %v588
        %v685 = vcvt.s32.f32 %v589
        %v686 = vcvt.s32.f32 %v590
        %v687 = vcvt.s32.f32 %v591
        %v688 = vcvt.s32.f32 %v592
        %v689 = vcvt.s32.f32 %v593
        %v690 = vcvt.s32.f32 %v594
        %v691 = vcvt.s32.f32 %v595
        %v692 = vcvt.s32.f32 %v596
        %v693 = vcvt.s32.f32 %v597
        %v694 = vcvt.s32.f32 %v598
        %v695 = vcvt.s32.f32 %v599
        %v696 = vcvt.s32.f32 %v600
        %v697 = vcvt.s32.f32 %v601
        %v698 = vcvt.s32.f32 %v602
        %v699 = vld [vmem:[%s269] sm:$0xff]
        %v700 = vld [vmem:[%s269 + $0x8] sm:$0xff]
        %v701 = vld [vmem:[%s269 + $0x10] sm:$0xff]
        %v702 = vld [vmem:[%s269 + $0x18] sm:$0xff]
        %v703 = vld [vmem:[%s269 + $0x20] sm:$0xff]
        %v704 = vld [vmem:[%s269 + $0x28] sm:$0xff]
        %v705 = vld [vmem:[%s269 + $0x30] sm:$0xff]
        %v706 = vld [vmem:[%s269 + $0x38] sm:$0xff]
        %v707 = vld [vmem:[%s269 + $0x40] sm:$0xff]
        %v708 = vld [vmem:[%s269 + $0x48] sm:$0xff]
        %v709 = vld [vmem:[%s269 + $0x50] sm:$0xff]
        %v710 = vld [vmem:[%s269 + $0x58] sm:$0xff]
        %711 = vmatprep.subr.mxu0 %v604
        %712 = vmatpush1.msra.mxu0 %v603
        %713 = vmatprep.subr.mxu0 %v606
        %714 = vmatpush1.msra.mxu0 %v605
        %715 = vmatprep.subr.mxu0 %v608
        %716 = vmatpush1.msra.mxu0 %v607
        %717 = vmatprep.subr.mxu0 %v610
        %718 = vmatpush1.msra.mxu0 %v609
        %719 = vmatprep.subr.mxu0 %v612
        %720 = vmatpush1.msra.mxu0 %v611
        %721 = vmatprep.subr.mxu0 %v614
        %722 = vmatpush1.msra.mxu0 %v613
        %723 = vmatprep.subr.mxu0 %v616
        %724 = vmatpush1.msra.mxu0 %v615
        %725 = vmatprep.subr.mxu0 %v618
        %726 = vmatpush1.msra.mxu0 %v617
        %727 = vmatprep.subr.mxu0 %v620
        %728 = vmatpush1.msra.mxu0 %v619
        %729 = vmatprep.subr.mxu0 %v622
        %730 = vmatpush1.msra.mxu0 %v621
        %731 = vmatprep.subr.mxu0 %v624
        %732 = vmatpush1.msra.mxu0 %v623
        %733 = vmatprep.subr.mxu0 %v626
        %734 = vmatpush1.msra.mxu0 %v625
        %735 = vmatprep.subr.mxu0 %v628
        %736 = vmatpush1.msra.mxu0 %v627
        %737 = vmatprep.subr.mxu0 %v630
        %738 = vmatpush1.msra.mxu0 %v629
        %739 = vmatprep.subr.mxu0 %v632
        %740 = vmatpush1.msra.mxu0 %v631
        %741 = vmatprep.subr.mxu0 %v634
        %742 = vmatpush1.msra.mxu0 %v633
        %743 = vmatprep.subr.mxu0 %v636
        %744 = vmatpush1.msra.mxu0 %v635
        %745 = vmatprep.subr.mxu0 %v638
        %746 = vmatpush1.msra.mxu0 %v637
        %747 = vmatprep.subr.mxu0 %v640
        %748 = vmatpush1.msra.mxu0 %v639
        %749 = vmatprep.subr.mxu0 %v642
        %750 = vmatpush1.msra.mxu0 %v641
        %751 = vmatprep.subr.mxu0 %v644
        %752 = vmatpush1.msra.mxu0 %v643
        %753 = vmatprep.subr.mxu0 %v646
        %754 = vmatpush1.msra.mxu0 %v645
        %755 = vmatprep.subr.mxu0 %v648
        %756 = vmatpush1.msra.mxu0 %v647
        %757 = vmatprep.subr.mxu0 %v650
        %758 = vmatpush1.msra.mxu0 %v649
        %759 = vmatprep.subr.mxu0 %v652
        %760 = vmatpush1.msra.mxu0 %v651
        %761 = vmatprep.subr.mxu0 %v654
        %762 = vmatpush1.msra.mxu0 %v653
        %763 = vmatprep.subr.mxu0 %v656
        %764 = vmatpush1.msra.mxu0 %v655
        %765 = vmatprep.subr.mxu0 %v658
        %766 = vmatpush1.msra.mxu0 %v657
        %767 = vmatprep.subr.mxu0 %v660
        %768 = vmatpush1.msra.mxu0 %v659
        %769 = vmatprep.subr.mxu0 %v662
        %770 = vmatpush1.msra.mxu0 %v661
        %771 = vmatprep.subr.mxu0 %v664
        %772 = vmatpush1.msra.mxu0 %v663
        %773 = vmatprep.subr.mxu0 %v666
        %774 = vmatpush1.msra.mxu0 %v665
        %775 = vmatprep.mubr.f32.mxu0 %v700
        %776 = vmatmul.mubr.f32.gmra.mrb[0].mxu0 %v699
        %v777 = vpop.f32.mrb[0].mxu0
        %v778 = vadd.f32 0.0, %v777
        %v779 = vpop.f32.mrb[0].mxu0
        %v780 = vadd.f32 0.0, %v779
        %781 = vmatprep.mubr.f32.mxu0 %v703
        %782 = vmatmul.mubr.f32.gmra.mrb[0].mxu0 %v702
        %v783 = vpop.f32.mrb[0].mxu0
        %v784 = vadd.f32 0.0, %v783
        %v785 = vpop.f32.mrb[0].mxu0
        %v786 = vadd.f32 0.0, %v785
        %787 = vmatprep.mubr.f32.mxu0 %v706
        %788 = vmatmul.mubr.f32.gmra.mrb[0].mxu0 %v705
        %v789 = vpop.f32.mrb[0].mxu0
        %v790 = vadd.f32 0.0, %v789
        %v791 = vpop.f32.mrb[0].mxu0
        %v792 = vadd.f32 0.0, %v791
        %793 = vmatprep.mubr.f32.mxu0 %v709
        %794 = vmatmul.mubr.f32.gmra.mrb[0].mxu0 %v708
        %v795 = vpop.f32.mrb[0].mxu0
        %v796 = vadd.f32 0.0, %v795
        %v797 = vpop.f32.mrb[0].mxu0
        %v798 = vadd.f32 0.0, %v797
        %799 = vdwg.mxu0
        %800 = vmatprep.subr.mxu0 %v668
        %801 = vmatpush1.msra.mxu0 %v667
        %802 = vmatprep.subr.mxu0 %v670
        %803 = vmatpush1.msra.mxu0 %v669
        %804 = vmatprep.subr.mxu0 %v672
        %805 = vmatpush1.msra.mxu0 %v671
        %806 = vmatprep.subr.mxu0 %v674
        %807 = vmatpush1.msra.mxu0 %v673
        %808 = vmatprep.subr.mxu0 %v676
        %809 = vmatpush1.msra.mxu0 %v675
        %810 = vmatprep.subr.mxu0 %v678
        %811 = vmatpush1.msra.mxu0 %v677
        %812 = vmatprep.subr.mxu0 %v680
        %813 = vmatpush1.msra.mxu0 %v679
        %814 = vmatprep.subr.mxu0 %v682
        %815 = vmatpush1.msra.mxu0 %v681
        %816 = vmatprep.subr.mxu0 %v684
        %817 = vmatpush1.msra.mxu0 %v683
        %818 = vmatprep.subr.mxu0 %v686
        %819 = vmatpush1.msra.mxu0 %v685
        %820 = vmatprep.subr.mxu0 %v688
        %821 = vmatpush1.msra.mxu0 %v687
        %822 = vmatprep.subr.mxu0 %v690
        %823 = vmatpush1.msra.mxu0 %v689
        %824 = vmatprep.subr.mxu0 %v692
        %825 = vmatpush1.msra.mxu0 %v691
        %826 = vmatprep.subr.mxu0 %v694
        %827 = vmatpush1.msra.mxu0 %v693
        %828 = vmatprep.subr.mxu0 %v696
        %829 = vmatpush1.msra.mxu0 %v695
        %830 = vmatprep.subr.mxu0 %v698
        %831 = vmatpush1.msra.mxu0 %v697
        %832 = vmatprep.subr.mxu0 0.0
        %833 = vmatpush1.msra.mxu0 0.0
        %834 = vmatprep.subr.mxu0 0.0
        %835 = vmatpush1.msra.mxu0 0.0
        %836 = vmatprep.subr.mxu0 0.0
        %837 = vmatpush1.msra.mxu0 0.0
        %838 = vmatprep.subr.mxu0 0.0
        %839 = vmatpush1.msra.mxu0 0.0
        %840 = vmatprep.subr.mxu0 0.0
        %841 = vmatpush1.msra.mxu0 0.0
        %842 = vmatprep.subr.mxu0 0.0
        %843 = vmatpush1.msra.mxu0 0.0
        %844 = vmatprep.subr.mxu0 0.0
        %845 = vmatpush1.msra.mxu0 0.0
        %846 = vmatprep.subr.mxu0 0.0
        %847 = vmatpush1.msra.mxu0 0.0
        %848 = vmatprep.subr.mxu0 0.0
        %849 = vmatpush1.msra.mxu0 0.0
        %850 = vmatprep.subr.mxu0 0.0
        %851 = vmatpush1.msra.mxu0 0.0
        %852 = vmatprep.subr.mxu0 0.0
        %853 = vmatpush1.msra.mxu0 0.0
        %854 = vmatprep.subr.mxu0 0.0
        %855 = vmatpush1.msra.mxu0 0.0
        %856 = vmatprep.subr.mxu0 0.0
        %857 = vmatpush1.msra.mxu0 0.0
        %858 = vmatprep.subr.mxu0 0.0
        %859 = vmatpush1.msra.mxu0 0.0
        %860 = vmatprep.subr.mxu0 0.0
        %861 = vmatpush1.msra.mxu0 0.0
        %862 = vmatprep.subr.mxu0 0.0
        %863 = vmatpush1.msra.mxu0 0.0
        %864 = vmatprep.mubr.f32.mxu0 0.0
        %865 = vmatmul.mubr.f32.gmra.mrb[0].mxu0 %v701
        %v866 = vpop.f32.mrb[0].mxu0
        %v867 = vadd.f32 %v778, %v866
        %v868 = vpop.f32.mrb[0].mxu0
        %v869 = vadd.f32 %v780, %v868
        %870 = vmatprep.mubr.f32.mxu0 0.0
        %871 = vmatmul.mubr.f32.gmra.mrb[0].mxu0 %v704
        %v872 = vpop.f32.mrb[0].mxu0
        %v873 = vadd.f32 %v784, %v872
        %v874 = vpop.f32.mrb[0].mxu0
        %v875 = vadd.f32 %v786, %v874
        %876 = vmatprep.mubr.f32.mxu0 0.0
        %877 = vmatmul.mubr.f32.gmra.mrb[0].mxu0 %v707
        %v878 = vpop.f32.mrb[0].mxu0
        %v879 = vadd.f32 %v790, %v878
        %v880 = vpop.f32.mrb[0].mxu0
        %v881 = vadd.f32 %v792, %v880
        %882 = vmatprep.mubr.f32.mxu0 0.0
        %883 = vmatmul.mubr.f32.gmra.mrb[0].mxu0 %v710
        %v884 = vpop.f32.mrb[0].mxu0
        %v885 = vadd.f32 %v796, %v884
        %v886 = vpop.f32.mrb[0].mxu0
        %v887 = vadd.f32 %v798, %v886
        %888 = vdwg.mxu0
        %v889 = vld [vmem:[%s278] sm:$0xff]
        %v890 = vld [vmem:[#allocation2] sm:$0xff]
        %v891 = vld [vmem:[#allocation2 + $0x8] sm:$0xff]
        %v893 = vlaneseq
        %v894 = vshrl.u32 %v893, 7
        %v895 = vsub.s32 0, %v894
        %v896 = vrot.slane %v889, %v895
        %v897 = vlaneseq
        %v898 = vshrl.u32 %v897, 7
        %v899 = vsub.s32 4, %v898
        %v900 = vrot.slane %v889, %v899
        %v903 = vlaneseq
        %v904 = vshrl.u32 %v903, 7
        %v905 = vsub.s32 0, %v904
        %v906 = vrot.slane %v896, %v905
        %v907 = vlaneseq
        %v908 = vshrl.u32 %v907, 7
        %v909 = vsub.s32 0, %v908
        %v910 = vrot.slane %v900, %v909
        %v911 = vmul.f32 %v906, %v867
        %v912 = vmul.f32 %v910, %v869
        %v913 = vlaneseq
        %v914 = vshrl.u32 %v913, 7
        %v915 = vsub.s32 1, %v914
        %v916 = vrot.slane %v889, %v915
        %v917 = vlaneseq
        %v918 = vshrl.u32 %v917, 7
        %v919 = vsub.s32 5, %v918
        %v920 = vrot.slane %v889, %v919
        %v923 = vlaneseq
        %v924 = vshrl.u32 %v923, 7
        %v925 = vsub.s32 1, %v924
        %v926 = vrot.slane %v916, %v925
        %v927 = vlaneseq
        %v928 = vshrl.u32 %v927, 7
        %v929 = vsub.s32 1, %v928
        %v930 = vrot.slane %v920, %v929
        %v931 = vmul.f32 %v926, %v873
        %v932 = vmul.f32 %v930, %v875
        %v933 = vadd.f32 %v911, %v931
        %v934 = vadd.f32 %v912, %v932
        %v935 = vlaneseq
        %v936 = vshrl.u32 %v935, 7
        %v937 = vsub.s32 2, %v936
        %v938 = vrot.slane %v889, %v937
        %v939 = vlaneseq
        %v940 = vshrl.u32 %v939, 7
        %v941 = vsub.s32 6, %v940
        %v942 = vrot.slane %v889, %v941
        %v945 = vlaneseq
        %v946 = vshrl.u32 %v945, 7
        %v947 = vsub.s32 2, %v946
        %v948 = vrot.slane %v938, %v947
        %v949 = vlaneseq
        %v950 = vshrl.u32 %v949, 7
        %v951 = vsub.s32 2, %v950
        %v952 = vrot.slane %v942, %v951
        %v953 = vmul.f32 %v948, %v879
        %v954 = vmul.f32 %v952, %v881
        %v955 = vadd.f32 %v933, %v953
        %v956 = vadd.f32 %v934, %v954
        %v957 = vlaneseq
        %v958 = vshrl.u32 %v957, 7
        %v959 = vsub.s32 3, %v958
        %v960 = vrot.slane %v889, %v959
        %v961 = vlaneseq
        %v962 = vshrl.u32 %v961, 7
        %v963 = vsub.s32 7, %v962
        %v964 = vrot.slane %v889, %v963
        %v967 = vlaneseq
        %v968 = vshrl.u32 %v967, 7
        %v969 = vsub.s32 3, %v968
        %v970 = vrot.slane %v960, %v969
        %v971 = vlaneseq
        %v972 = vshrl.u32 %v971, 7
        %v973 = vsub.s32 3, %v972
        %v974 = vrot.slane %v964, %v973
        %v975 = vmul.f32 %v970, %v885
        %v976 = vmul.f32 %v974, %v887
        %v977 = vadd.f32 %v955, %v975
        %v978 = vadd.f32 %v956, %v976
        %v979 = vadd.f32 %v890, %v977
        %v980 = vadd.f32 %v891, %v978
        %981 = vst [vmem:[#allocation2] sm:$0xff] %v979
        %982 = vst [vmem:[#allocation2 + $0x8] sm:$0xff] %v980
        // Predicated region
        $region45: #{tpu_custom_call.1} parent=31 // pred_check
          %p983 = pneg %p335
        $region46: #{tpu_custom_call.1} parent=31 // pred_check_branch
          %985 = sbr.rel (%p983) target = $region48
        $region47: #{tpu_custom_call.1} parent=31 // pred_region
          %v986 = vld [vmem:[#allocation2] sm:$0xf]
          %v987 = vld [vmem:[#allocation2 + $0x8] sm:$0xf]
          %v990 = vcombine.low %v986, %v987
          %992 = vst [vmem:[%s313] sm:$0xff] %v990
        $region48: #{tpu_custom_call.1} parent=31 // pred_fallthru
          _
        %s993 = sand.u32 %s161, 1
        %s994 = scalar_lea.sflag [#allocation7], %s993
        %s995 = sand.u32 %s161, 1
        %s996 = smul.addr %s995, 8
        %s997 = scalar_lea.vmem [#allocation10], %s996
        // Predicated region
        $region49: #{tpu_custom_call.1} parent=31 // pred_check
          %p998 = pneg %p171
        $region50: #{tpu_custom_call.1} parent=31 // pred_check_branch
          %1000 = sbr.rel (%p998) target = $region52
        $region51: #{tpu_custom_call.1} parent=31 // pred_region
          %s1001 = smul.u32 2, %s36
          %s1003 = ssub.s32 128, 128
          %1004 = vsyncadd %s994, %s1003
          %s1005 = smul.addr %s35, 2
          %s1006 = sadd.s32 %s1001, %s1005
          %s1007 = smul.addr %s1006, 64
          %s1008 = scalar_lea.hbm %s4, %s1007
          %s1010 = sshll.u32 %s997, 4
          %s1011 = int_to_ptr.vmem [resolvable:$true] %s1010
          %1013 = dma.vmem_to_hbm [thread:$0]  %s1011, 128, %s1008, %s994
        $region52: #{tpu_custom_call.1} parent=31 // pred_fallthru
          _
      $region32: #{tpu_custom_call.1} parent=5 // pred_fallthru
        _
      %p1014 = scmp.le.s32.totalorder 2, %s25
      // Predicated region
      $region53: #{tpu_custom_call.1} parent=5 // pred_check
        %p1015 = pneg %p1014
      $region54: #{tpu_custom_call.1} parent=5 // pred_check_branch
        %1017 = sbr.rel (%p1015) target = $region56
      $region55: #{tpu_custom_call.1} parent=5 // pred_region
        %s1018 = ssub.s32 %s25, 2
        // Predicated region
        $region57: #{tpu_custom_call.1} parent=55 // pred_check
          %p1019 = pneg %p177
        $region58: #{tpu_custom_call.1} parent=55 // pred_check_branch
          %1021 = sbr.rel (%p1019) target = $region60
        $region59: #{tpu_custom_call.1} parent=55 // pred_region
          %s1022 = sand.u32 %s162, 1
          %s1023 = scalar_lea.sflag [#allocation7], %s1022
          %s1024 = sand.u32 %s162, 1
          %s1025 = smul.addr %s1024, 8
          %s1026 = scalar_lea.vmem [#allocation10], %s1025
          %1027 = dma.done %s1023, 128
        $region60: #{tpu_custom_call.1} parent=55 // pred_fallthru
          _
      $region56: #{tpu_custom_call.1} parent=5 // pred_fallthru
        _
    $region6: #{tpu_custom_call.1} parent=1 // loop_footer
      %s29 = sadd.s32 1, %s25
    $region7: #{tpu_custom_call.1} parent=1 // loop_footer_branch
      %24 = sbr.rel target = $region3
    $region8: #{tpu_custom_call.1} parent=1 // loop_exit
      _
    %1028 = vsyncpa [#allocation6], 1
    %s1029 = scalar_lea.sflag [#allocation6], 1
    %1030 = vsyncpa %s1029, 1
    %1031 = vsyncpa [#allocation9], 1
    %s1032 = scalar_lea.sflag [#allocation9], 1
    %1033 = vsyncpa %s1032, 1
    %1034 = vsyncpa [#allocation7], 1
    %s1035 = scalar_lea.sflag [#allocation7], 1
    %1036 = vsyncpa %s1035, 1

</llo_original>
